<compile_context>
chip_gen: v6e
topology: v6e:2x2x1
jax: 0.10.0
libtpu: 0.0.40
codegen_flags: <defaults>
</compile_context>

<pallas_src>
import functools

import jax
import jax.numpy as jnp
from jax.experimental import pallas as pl
from jax.experimental.pallas import tpu as pltpu

_LANE = 128
_SUB = 8


def _compute(params_ref, x_ref):
    """Shared body: broadcast FMAs (VPU) + sigmoids (EUP), all f32."""
    # params_ref: SMEM f32[9] = [w00, w01, w10, w11, b0, b1, wo0, wo1, bo]
    w00 = params_ref[0]
    w01 = params_ref[1]
    w10 = params_ref[2]
    w11 = params_ref[3]
    b0 = params_ref[4]
    b1 = params_ref[5]
    wo0 = params_ref[6]
    wo1 = params_ref[7]
    bo = params_ref[8]

    x0 = x_ref[0].astype(jnp.float32)   # dense (TILE_R, 128) slab
    x1 = x_ref[1].astype(jnp.float32)   # dense (TILE_R, 128) slab

    # hidden = sigmoid(x @ Wh^T + bh), expanded into broadcast FMAs.
    h0 = jax.nn.sigmoid(x0 * w00 + x1 * w01 + b0)
    h1 = jax.nn.sigmoid(x0 * w10 + x1 * w11 + b1)
    # out = sigmoid(hidden @ Wo^T + bo)
    o = jax.nn.sigmoid(h0 * wo0 + h1 * wo1 + bo)
    return o, h0, h1


def simplenn_kernel(params_ref, x_ref, out_ref, hid_ref):
    o, h0, h1 = _compute(params_ref, x_ref)
    out_ref[...] = o.astype(out_ref.dtype)
    # Full-slab (TILE_R, 128) stores -- no masked single-sublane writes.
    hid_ref[0] = h0.astype(hid_ref.dtype)
    hid_ref[1] = h1.astype(hid_ref.dtype)


def simplenn_kernel_no_hidden(params_ref, x_ref, out_ref):
    o, _, _ = _compute(params_ref, x_ref)
    out_ref[...] = o.astype(out_ref.dtype)


def _pick_tiling(n, max_tile_r):
    """Choose a sublane-dense tile; guarantee >=2 grid steps when possible."""
    r_needed = pl.cdiv(n, _LANE)                    # rows of 128 lanes to cover n
    r_needed = pl.cdiv(r_needed, _SUB) * _SUB       # sublane-dense (multiple of 8)
    if r_needed >= 2 * _SUB:
        # Split into at least 2 tiles so v7x megacore can use both TensorCores.
        tile_r = min(max_tile_r, pl.cdiv(r_needed, 2))
    else:
        tile_r = r_needed
    tile_r = pl.cdiv(tile_r, _SUB) * _SUB
    r_total = pl.cdiv(r_needed, tile_r) * tile_r
    return tile_r, r_total


@functools.partial(
    jax.jit, static_argnames=("max_tile_r", "return_hidden", "io_dtype"))
def simplenn_forward(x, w_hidden, b_hidden, w_output, b_output, *,
                     max_tile_r=1024, return_hidden=True,
                     io_dtype=jnp.float32):
    """Forward pass matching the PyTorch module.

    Returns (out (N,1), hidden (N,2)) by default, or just out (N,1) when
    return_hidden=False.  The whole function is jitted so the layout plumbing
    (transpose / pad / reshape) fuses rather than costing extra HBM passes.
    """
    n = x.shape[0]
    tile_r, r_total = _pick_tiling(n, max_tile_r)
    n_pad = r_total * _LANE
    grid = (r_total // tile_r,)

    # Feature-major, batch folded onto (sublane, lane): (2, R, 128).
    xt = x.astype(io_dtype).T                              # (2, N)
    if n_pad != n:
        xt = jnp.pad(xt, ((0, 0), (0, n_pad - n)))
    x_tiled = xt.reshape(2, r_total, _LANE)

    # Pack the 9 scalar parameters into one SMEM-resident array (always f32).
    params = jnp.concatenate([
        w_hidden.reshape(-1),     # w00, w01, w10, w11   (PyTorch (out,in) layout)
        b_hidden.reshape(-1),     # b0, b1
        w_output.reshape(-1),     # wo0, wo1
        b_output.reshape(-1),     # bo
    ]).astype(jnp.float32)

    in_specs = [
        pl.BlockSpec(memory_space=pltpu.MemorySpace.SMEM),          # params (9,)
        pl.BlockSpec((2, tile_r, _LANE), lambda i: (0, i, 0)),      # x
    ]
    out_specs = [pl.BlockSpec((tile_r, _LANE), lambda i: (i, 0))]   # out
    out_shape = [jax.ShapeDtypeStruct((r_total, _LANE), io_dtype)]
    if return_hidden:
        out_specs.append(pl.BlockSpec((2, tile_r, _LANE), lambda i: (0, i, 0)))
        out_shape.append(jax.ShapeDtypeStruct((2, r_total, _LANE), io_dtype))
        kernel = simplenn_kernel
    else:
        kernel = simplenn_kernel_no_hidden

    results = pl.pallas_call(
        kernel,
        grid=grid,
        in_specs=in_specs,
        out_specs=out_specs,
        out_shape=out_shape,
        compiler_params=pltpu.CompilerParams(
            dimension_semantics=("parallel",),
            vmem_limit_bytes=32 * 1024 * 1024,
        ),
    )(params, x_tiled)

    if return_hidden:
        out_t, hid_t = results
    else:
        (out_t,) = results

    out = out_t.reshape(n_pad)[:n].reshape(n, 1)
    if not return_hidden:
        return out
    hidden = hid_t.reshape(2, n_pad)[:, :n].T                      # (N, 2)
    return out, hidden


def init_params(key):
    """Deterministic init mirroring the PyTorch __init__ shapes/distributions."""
    k1, k2, k3, k4 = jax.random.split(key, 4)
    # nn.init.xavier_normal_ on hidden.weight (2, 2): std = sqrt(2 / (fan_in + fan_out))
    xavier_std = jnp.sqrt(2.0 / (2 + 2))
    w_hidden = xavier_std * jax.random.normal(k1, (2, 2), dtype=jnp.float32)
    # hidden.bias default init: U(-1/sqrt(fan_in), 1/sqrt(fan_in)), fan_in = 2
    bound_h = 1.0 / jnp.sqrt(2.0)
    b_hidden = jax.random.uniform(k2, (2,), dtype=jnp.float32,
                                  minval=-bound_h, maxval=bound_h)
    # nn.init.normal_ on output.weight (1, 2): N(0, 1)
    w_output = jax.random.normal(k3, (1, 2), dtype=jnp.float32)
    # output.bias default init: U(-1/sqrt(2), 1/sqrt(2))
    b_output = jax.random.uniform(k4, (1,), dtype=jnp.float32,
                                  minval=-bound_h, maxval=bound_h)
    return w_hidden, b_hidden, w_output, b_output


if __name__ == "__main__":
    key = jax.random.PRNGKey(0)
    k_x, k_p = jax.random.split(key)

    batch = 8
    x = jax.random.normal(k_x, (batch, 2), dtype=jnp.float32)
    w_hidden, b_hidden, w_output, b_output = init_params(k_p)

    out, hidden_out = simplenn_forward(x, w_hidden, b_hidden, w_output, b_output)
    jax.block_until_ready((out, hidden_out))

    # Inference-only path (no hidden writeback) also has to run clean.
    out_only = simplenn_forward(x, w_hidden, b_hidden, w_output, b_output,
                                return_hidden=False)
    jax.block_until_ready(out_only)

    # Reference check in plain JAX (same math as the PyTorch forward).
    h_ref = jax.nn.sigmoid(x @ w_hidden.T + b_hidden)
    o_ref = jax.nn.sigmoid(h_ref @ w_output.T + b_output)
    assert out.shape == (batch, 1) and hidden_out.shape == (batch, 2)
    assert jnp.allclose(hidden_out, h_ref, atol=1e-6), "hidden mismatch"
    assert jnp.allclose(out, o_ref, atol=1e-6), "output mismatch"
    assert jnp.allclose(out_only, o_ref, atol=1e-6), "output (no-hidden) mismatch"

    print("KERNEL_OK")
</pallas_src>

<mosaic_0001>
module attributes {stable_mosaic.version = 11 : i64} {
  func.func @simplenn_kernel(%arg0: i32, %arg1: memref<9xf32, #tpu.memory_space<smem>>, %arg2: memref<2x8x128xf32, #tpu.memory_space<vmem>>, %arg3: memref<8x128xf32, #tpu.memory_space<vmem>>, %arg4: memref<2x8x128xf32, #tpu.memory_space<vmem>>) attributes {dimension_semantics = [#tpu.dimension_semantics<parallel>], iteration_bounds = array<i64: 1>, scalar_prefetch = 0 : i64, scratch_operands = 0 : i64, tpu.core_type = #tpu.core_type<tc>, window_params = [{transform_indices = @transform_0, window_bounds = array<i64: 9>}, {transform_indices = @transform_1, window_bounds = array<i64: 2, 8, 128>}, {transform_indices = @transform_2, window_bounds = array<i64: 8, 128>}, {transform_indices = @transform_3, window_bounds = array<i64: 2, 8, 128>}]} {
    %c0 = arith.constant 0 : index
    %0 = memref.load %arg1[%c0] : memref<9xf32, #tpu.memory_space<smem>>
    %c1 = arith.constant 1 : index
    %1 = memref.load %arg1[%c1] : memref<9xf32, #tpu.memory_space<smem>>
    %c2 = arith.constant 2 : index
    %2 = memref.load %arg1[%c2] : memref<9xf32, #tpu.memory_space<smem>>
    %c3 = arith.constant 3 : index
    %3 = memref.load %arg1[%c3] : memref<9xf32, #tpu.memory_space<smem>>
    %c4 = arith.constant 4 : index
    %4 = memref.load %arg1[%c4] : memref<9xf32, #tpu.memory_space<smem>>
    %c5 = arith.constant 5 : index
    %5 = memref.load %arg1[%c5] : memref<9xf32, #tpu.memory_space<smem>>
    %c6 = arith.constant 6 : index
    %6 = memref.load %arg1[%c6] : memref<9xf32, #tpu.memory_space<smem>>
    %c7 = arith.constant 7 : index
    %7 = memref.load %arg1[%c7] : memref<9xf32, #tpu.memory_space<smem>>
    %c8 = arith.constant 8 : index
    %8 = memref.load %arg1[%c8] : memref<9xf32, #tpu.memory_space<smem>>
    %c0_0 = arith.constant 0 : index
    %c0_1 = arith.constant 0 : index
    %c0_2 = arith.constant 0 : index
    %9 = vector.load %arg2[%c0_0, %c0_1, %c0_2] : memref<2x8x128xf32, #tpu.memory_space<vmem>>, vector<1x8x128xf32>
    %10 = vector.shape_cast %9 : vector<1x8x128xf32> to vector<8x128xf32>
    %c1_3 = arith.constant 1 : index
    %c0_4 = arith.constant 0 : index
    %c0_5 = arith.constant 0 : index
    %11 = vector.load %arg2[%c1_3, %c0_4, %c0_5] : memref<2x8x128xf32, #tpu.memory_space<vmem>>, vector<1x8x128xf32>
    %12 = vector.shape_cast %11 : vector<1x8x128xf32> to vector<8x128xf32>
    %13 = vector.broadcast %0 : f32 to vector<8x128xf32>
    %14 = arith.mulf %10, %13 : vector<8x128xf32>
    %15 = vector.broadcast %1 : f32 to vector<8x128xf32>
    %16 = arith.mulf %12, %15 : vector<8x128xf32>
    %17 = arith.addf %14, %16 : vector<8x128xf32>
    %18 = vector.broadcast %4 : f32 to vector<8x128xf32>
    %19 = arith.addf %17, %18 : vector<8x128xf32>
    %20 = arith.negf %19 : vector<8x128xf32>
    %21 = math.exp %20 : vector<8x128xf32>
    %cst = arith.constant 1.000000e+00 : f32
    %22 = vector.broadcast %cst : f32 to vector<8x128xf32>
    %23 = arith.addf %22, %21 : vector<8x128xf32>
    %24 = arith.divf %22, %23 : vector<8x128xf32>
    %25 = vector.broadcast %2 : f32 to vector<8x128xf32>
    %26 = arith.mulf %10, %25 : vector<8x128xf32>
    %27 = vector.broadcast %3 : f32 to vector<8x128xf32>
    %28 = arith.mulf %12, %27 : vector<8x128xf32>
    %29 = arith.addf %26, %28 : vector<8x128xf32>
    %30 = vector.broadcast %5 : f32 to vector<8x128xf32>
    %31 = arith.addf %29, %30 : vector<8x128xf32>
    %32 = arith.negf %31 : vector<8x128xf32>
    %33 = math.exp %32 : vector<8x128xf32>
    %cst_6 = arith.constant 1.000000e+00 : f32
    %34 = vector.broadcast %cst_6 : f32 to vector<8x128xf32>
    %35 = arith.addf %34, %33 : vector<8x128xf32>
    %36 = arith.divf %34, %35 : vector<8x128xf32>
    %37 = vector.broadcast %6 : f32 to vector<8x128xf32>
    %38 = arith.mulf %24, %37 : vector<8x128xf32>
    %39 = vector.broadcast %7 : f32 to vector<8x128xf32>
    %40 = arith.mulf %36, %39 : vector<8x128xf32>
    %41 = arith.addf %38, %40 : vector<8x128xf32>
    %42 = vector.broadcast %8 : f32 to vector<8x128xf32>
    %43 = arith.addf %41, %42 : vector<8x128xf32>
    %44 = arith.negf %43 : vector<8x128xf32>
    %45 = math.exp %44 : vector<8x128xf32>
    %cst_7 = arith.constant 1.000000e+00 : f32
    %46 = vector.broadcast %cst_7 : f32 to vector<8x128xf32>
    %47 = arith.addf %46, %45 : vector<8x128xf32>
    %48 = arith.divf %46, %47 : vector<8x128xf32>
    %c0_8 = arith.constant 0 : index
    %c0_9 = arith.constant 0 : index
    %49 = vector.load %arg3[%c0_8, %c0_9] : memref<8x128xf32, #tpu.memory_space<vmem>>, vector<8x128xf32>
    tpu.vector_store %arg3[%c0_8, %c0_9], %48 {strides = array<i32>} : memref<8x128xf32, #tpu.memory_space<vmem>>, vector<8x128xf32>,
    %c0_10 = arith.constant 0 : index
    %c0_11 = arith.constant 0 : index
    %c0_12 = arith.constant 0 : index
    %50 = vector.load %arg4[%c0_10, %c0_11, %c0_12] : memref<2x8x128xf32, #tpu.memory_space<vmem>>, vector<1x8x128xf32>
    %51 = vector.shape_cast %50 : vector<1x8x128xf32> to vector<8x128xf32>
    %52 = vector.shape_cast %24 : vector<8x128xf32> to vector<1x8x128xf32>
    tpu.vector_store %arg4[%c0_10, %c0_11, %c0_12], %52 {strides = array<i32>} : memref<2x8x128xf32, #tpu.memory_space<vmem>>, vector<1x8x128xf32>,
    %c1_13 = arith.constant 1 : index
    %c0_14 = arith.constant 0 : index
    %c0_15 = arith.constant 0 : index
    %53 = vector.load %arg4[%c1_13, %c0_14, %c0_15] : memref<2x8x128xf32, #tpu.memory_space<vmem>>, vector<1x8x128xf32>
    %54 = vector.shape_cast %53 : vector<1x8x128xf32> to vector<8x128xf32>
    %55 = vector.shape_cast %36 : vector<8x128xf32> to vector<1x8x128xf32>
    tpu.vector_store %arg4[%c1_13, %c0_14, %c0_15], %55 {strides = array<i32>} : memref<2x8x128xf32, #tpu.memory_space<vmem>>, vector<1x8x128xf32>,
    return
  }
  func.func @transform_0(%arg0: i32) -> i32 {
    %c0_i32 = arith.constant 0 : i32
    %c0_i32_0 = arith.constant 0 : i32
    return %c0_i32 : i32
  }
  func.func @transform_1(%arg0: i32) -> (i32, i32, i32) {
    %c0_i32 = arith.constant 0 : i32
    %c0_i32_0 = arith.constant 0 : i32
    %c0_i32_1 = arith.constant 0 : i32
    return %c0_i32, %arg0, %c0_i32_0 : i32, i32, i32
  }
  func.func @transform_2(%arg0: i32) -> (i32, i32) {
    %c0_i32 = arith.constant 0 : i32
    %c0_i32_0 = arith.constant 0 : i32
    return %arg0, %c0_i32 : i32, i32
  }
  func.func @transform_3(%arg0: i32) -> (i32, i32, i32) {
    %c0_i32 = arith.constant 0 : i32
    %c0_i32_0 = arith.constant 0 : i32
    %c0_i32_1 = arith.constant 0 : i32
    return %c0_i32, %arg0, %c0_i32_0 : i32, i32, i32
  }
}

</mosaic_0001>

<llo_original>
// kernel: simplenn_forward.1
$region0: #{simplenn_forward.1}
  #allocation0 [shape = 'u32[]', space=smem, size = 0x4, offset = 0x4, fixed_abs, tag = 'smem constant byte address 0x4 - core index']
  #allocation1 [shape = 'u32[144,128]{1,0:T(1,128)}', space=vmem, size = 0x12000, scoped, tag = 'internal scratch']
  %s0 = inlined_call_operand.vmem [shape: f32[9], index: 0, kind: input, shape index: {}]
  %s1 = inlined_call_operand.vmem [shape: f32[2,8,128], index: 1, kind: input, shape index: {}]
  %s2 = inlined_call_operand.vmem [shape: f32[8,128], index: 2, kind: output, shape index: {0}]
  %s3 = inlined_call_operand.vmem [shape: f32[2,8,128], index: 3, kind: output, shape index: {1}]
  %4 = xla_tuple %s2, %s3
  %s5 = sld [smem:[#allocation0]]
  $region30: #{simplenn_forward.1} parent=0
    _
  %s7 = ssub.s32 1, %s5
  %s8 = scalar_select 0, %s7, %s5
  $region1: #{simplenn_forward.1} parent=0
    #allocation2 [shape = 'u8[512]{0}', space=smem, size = 0x200, scoped, tag = 'input window, operand 0, single buffered']
    #allocation3 [shape = 's32[1]{0}', space=sflag, size = 0x4, scoped, tag = 'scoped memory for simplenn_forward.1']
    %9 = vsyncpa [#allocation3], 0
    // Predicated region
    $region2: #{simplenn_forward.1} parent=1 // pred_check
      _
    $region3: #{simplenn_forward.1} parent=1 // pred_check_branch
      %11 = sbr.rel (0) target = $region5
    $region4: #{simplenn_forward.1} parent=1 // pred_region
      %s13 = ssub.s32 16, 16
      %14 = vsyncadd [#allocation3], %s13
      %s16 = sshll.u32 %s0, 4
      %s17 = int_to_ptr.vmem [resolvable:$true] %s16
      %19 = dma.vmem_to_smem %s17, 16, [#allocation2], [#allocation3]
    $region5: #{simplenn_forward.1} parent=1 // pred_fallthru
      _
    // Predicated region
    $region6: #{simplenn_forward.1} parent=1 // pred_check
      _
    $region7: #{simplenn_forward.1} parent=1 // pred_check_branch
      %21 = sbr.rel (0) target = $region9
    $region8: #{simplenn_forward.1} parent=1 // pred_region
      _
    $region9: #{simplenn_forward.1} parent=1 // pred_fallthru
      _
    // Predicated region
    $region10: #{simplenn_forward.1} parent=1 // pred_check
      _
    $region11: #{simplenn_forward.1} parent=1 // pred_check_branch
      %23 = sbr.rel (0) target = $region13
    $region12: #{simplenn_forward.1} parent=1 // pred_region
      %24 = dma.done [#allocation3], 16
    $region13: #{simplenn_forward.1} parent=1 // pred_fallthru
      _
    %25 = sfence
    %s26 = sld [smem:[#allocation2]]
    %s27 = sld [smem:[#allocation2 + $0x1]]
    %s28 = sld [smem:[#allocation2 + $0x2]]
    %s29 = sld [smem:[#allocation2 + $0x3]]
    %s30 = sld [smem:[#allocation2 + $0x4]]
    %s31 = sld [smem:[#allocation2 + $0x5]]
    %s32 = sld [smem:[#allocation2 + $0x6]]
    %s33 = sld [smem:[#allocation2 + $0x7]]
    %s34 = sld [smem:[#allocation2 + $0x8]]
    %v35 = vld [vmem:[%s1] sm:$0xff]
    %s36 = scalar_lea.vmem %s1, 8
    %v37 = vld [vmem:[%s36] sm:$0xff]
    %v38 = vstv %s26
    %v39 = vmul.f32 %v35, %v38
    %v40 = vstv %s27
    %v41 = vmul.f32 %v37, %v40
    %v42 = vadd.f32 %v39, %v41
    %v43 = vstv %s30
    %v44 = vadd.f32 %v42, %v43
    %v45 = vxor.u32 %v44, 2147483648
    %v46 = vmul.f32 %v45, 1.442695
    %v47 = vpow.pop %v46
    %v48 = vadd.f32 %v47, 1.0
    %v49 = vrcp.pop %v48
    %v50 = vmul.f32 1.0, %v49
    %v51 = vstv %s28
    %v52 = vmul.f32 %v35, %v51
    %v53 = vstv %s29
    %v54 = vmul.f32 %v37, %v53
    %v55 = vadd.f32 %v52, %v54
    %v56 = vstv %s31
    %v57 = vadd.f32 %v55, %v56
    %v58 = vxor.u32 %v57, 2147483648
    %v59 = vmul.f32 %v58, 1.442695
    %v60 = vpow.pop %v59
    %v61 = vadd.f32 %v60, 1.0
    %v62 = vrcp.pop %v61
    %v63 = vmul.f32 1.0, %v62
    %v64 = vstv %s32
    %v65 = vmul.f32 %v50, %v64
    %v66 = vstv %s33
    %v67 = vmul.f32 %v63, %v66
    %v68 = vadd.f32 %v65, %v67
    %v69 = vstv %s34
    %v70 = vadd.f32 %v68, %v69
    %v71 = vxor.u32 %v70, 2147483648
    %v72 = vmul.f32 %v71, 1.442695
    %v73 = vpow.pop %v72
    %v74 = vadd.f32 %v73, 1.0
    %v75 = vrcp.pop %v74
    %v76 = vmul.f32 1.0, %v75
    %77 = vst [vmem:[%s2] sm:$0xff] %v76
    %78 = vst [vmem:[%s3] sm:$0xff] %v50
    %s79 = scalar_lea.vmem %s3, 8
    %80 = vst [vmem:[%s79] sm:$0xff] %v63
    // Predicated region
    $region14: #{simplenn_forward.1} parent=1 // pred_check
      _
    $region15: #{simplenn_forward.1} parent=1 // pred_check_branch
      %82 = sbr.rel (0) target = $region17
    $region16: #{simplenn_forward.1} parent=1 // pred_region
      _
    $region17: #{simplenn_forward.1} parent=1 // pred_fallthru
      _
    // Predicated region
    $region18: #{simplenn_forward.1} parent=1 // pred_check
      _
    $region19: #{simplenn_forward.1} parent=1 // pred_check_branch
      %84 = sbr.rel (0) target = $region21
    $region20: #{simplenn_forward.1} parent=1 // pred_region
      _
    $region21: #{simplenn_forward.1} parent=1 // pred_fallthru
      _
    // Predicated region
    $region22: #{simplenn_forward.1} parent=1 // pred_check
      _
    $region23: #{simplenn_forward.1} parent=1 // pred_check_branch
      %86 = sbr.rel (0) target = $region25
    $region24: #{simplenn_forward.1} parent=1 // pred_region
      _
    $region25: #{simplenn_forward.1} parent=1 // pred_fallthru
      _
    // Predicated region
    $region26: #{simplenn_forward.1} parent=1 // pred_check
      _
    $region27: #{simplenn_forward.1} parent=1 // pred_check_branch
      %88 = sbr.rel (0) target = $region29
    $region28: #{simplenn_forward.1} parent=1 // pred_region
      _
    $region29: #{simplenn_forward.1} parent=1 // pred_fallthru
      _
    %89 = vsyncpa [#allocation3], 1

</llo_original>
